<compile_context>
chip_gen: v7x
topology: tpu7x:2x2x1
jax: 0.10.0
libtpu: 0.0.40
codegen_flags: <defaults>
</compile_context>

<pallas_src>
import numpy as np
import jax
import jax.numpy as jnp
from jax.experimental import pallas as pl
from jax.experimental.pallas import tpu as pltpu

HIDDEN = 1024
GROUPS = 16
GSIZE = HIDDEN // GROUPS  # 64
OUT_DIM = 4
EPS = 1e-5


def _resident(shape):
  """Full-array 2-D block that stays VMEM-resident across every grid step."""
  assert len(shape) == 2
  return pl.BlockSpec(tuple(shape), lambda t: (0, 0))


# ----------------------------- Pallas kernels ------------------------------ #

def encoder_kernel(x_ref, pos_ref,
                   we1_ref, be1_ref, we2_ref, be2_ref, we3_ref, be3_ref,
                   wp1_ref, bp1_ref, wp2_ref, bp2_ref, wp3_ref, bp3_ref,
                   feat_ref):
  # encoder(x): Linear(1,32) ReLU Linear(32,32) ReLU Linear(32,32)
  x = x_ref[...]                                     # [TN, 1]
  h = jnp.maximum(x * we1_ref[...] + be1_ref[...], 0.0)   # K=1 layer as broadcast
  h = jnp.maximum(
      jnp.dot(h, we2_ref[...], preferred_element_type=jnp.float32) + be2_ref[...], 0.0)
  feat_ref[:, 0:32] = (
      jnp.dot(h, we3_ref[...], preferred_element_type=jnp.float32) + be3_ref[...])

  # encoder_pos(pos): Linear(4,32) ReLU Linear(32,32) ReLU Linear(32,32)
  p = pos_ref[...]                                   # [TN, 4]
  wp = wp1_ref[...]                                  # [4, 32]
  acc = p[:, 0:1] * wp[0:1, :]
  for k in range(1, 4):                              # tiny-K layer as broadcast MACs
    acc = acc + p[:, k:k + 1] * wp[k:k + 1, :]
  hp = jnp.maximum(acc + bp1_ref[...], 0.0)
  hp = jnp.maximum(
      jnp.dot(hp, wp2_ref[...], preferred_element_type=jnp.float32) + bp2_ref[...], 0.0)
  feat_ref[:, 32:64] = (
      jnp.dot(hp, wp3_ref[...], preferred_element_type=jnp.float32) + bp3_ref[...])


def _gn_centered(c, gamma, beta, G, Gt):
  """GroupNorm on pre-centered activations (mean folded into the producing weights).

  Only the variance reduction ((c*c)@G, bf16, f32 acc) and the inv-std group
  broadcast (inv@Gt, bf16, f32 acc) touch the MXU; scale/shift run on the VPU.
  """
  var = jnp.dot((c * c).astype(jnp.bfloat16), G,
                preferred_element_type=jnp.float32) * (1.0 / GSIZE)     # [TE, 16]
  inv = jax.lax.rsqrt(var + EPS)                                        # [TE, 16]
  inv_f = jnp.dot(inv.astype(jnp.bfloat16), Gt,
                  preferred_element_type=jnp.float32)                   # [TE, HIDDEN]
  return c * inv_f * gamma + beta


def edgeconv_kernel(feat_ref, src_ref, dst_ref, batch_ref,
                    w1_ref, g1_ref, bt1_ref, w2_ref, g2_ref, bt2_ref,
                    w3_ref, b3_ref, G_ref, Gt_ref,
                    q_ref, node_acc, e_in):
  t = pl.program_id(0)
  n_nodes = feat_ref.shape[0]
  te = src_ref.shape[0]
  num_graphs = q_ref.shape[0]

  @pl.when(t == 0)
  def _():
    node_acc[...] = jnp.zeros_like(node_acc)

  f = feat_ref[...]                                                     # [N, 64] bf16

  # in-kernel one-hots from int32 indices (padded edges use index == n_nodes -> all-zero)
  node_iota = jax.lax.broadcasted_iota(jnp.int32, (te, n_nodes), 1)
  is_dst = node_iota == dst_ref[...]                                    # [TE, N]  x_i
  is_src = node_iota == src_ref[...]                                    # [TE, N]  x_j

  xi = jnp.dot(is_dst.astype(jnp.bfloat16), f,
               preferred_element_type=jnp.float32)                      # [TE, 64]
  xj = jnp.dot(is_src.astype(jnp.bfloat16), f,
               preferred_element_type=jnp.float32)                      # [TE, 64]

  # cat([x_i, x_j - x_i]) packed into one bf16 buffer -> single K=128 MXU dot for W1
  e_in[:, 0:64] = xi.astype(jnp.bfloat16)
  e_in[:, 64:128] = (xj - xi).astype(jnp.bfloat16)

  G = G_ref[...]
  Gt = Gt_ref[...]
  # w1_ref / w2_ref hold group-centered weights, so c1 / c2 are already mean-free.
  c1 = jnp.dot(e_in[...], w1_ref[...], preferred_element_type=jnp.float32)  # [TE,1024]
  a1 = jnp.maximum(_gn_centered(c1, g1_ref[...], bt1_ref[...], G, Gt), 0.0)
  c2 = jnp.dot(a1.astype(jnp.bfloat16), w2_ref[...],
               preferred_element_type=jnp.float32)                          # [TE,1024]
  a2 = jnp.maximum(_gn_centered(c2, g2_ref[...], bt2_ref[...], G, Gt), 0.0)
  msg = (jnp.dot(a2.astype(jnp.bfloat16), w3_ref[...],
                 preferred_element_type=jnp.float32) + b3_ref[...])         # [TE, 4]

  # scatter-add messages to target nodes on the VPU/XLU (accumulator stored as [4, N])
  sdst_f = is_dst.astype(jnp.float32)
  rows = [jnp.sum(sdst_f * msg[:, c:c + 1], axis=0, keepdims=True)
          for c in range(OUT_DIM)]                                          # 4 x [1, N]
  node_acc[...] += jnp.concatenate(rows, axis=0)                            # [4, N]

  # last edge tile: vectorized global max pool over graphs + single dense store
  @pl.when(t == pl.num_programs(0) - 1)
  def _():
    node_t = node_acc[...]                                                  # [4, N]
    graph_iota = jax.lax.broadcasted_iota(jnp.int32, (num_graphs, n_nodes), 0)
    in_graph = graph_iota == batch_ref[...]                                 # [B, N]
    neg = jnp.float32(jnp.finfo(jnp.float32).min)
    masked = jnp.where(in_graph[:, None, :], node_t[None, :, :], neg)       # [B, 4, N]
    q_ref[...] = jnp.max(masked, axis=-1)                                   # [B, 4]


# ------------------------------ JAX wrapper -------------------------------- #

def _center_group_columns(w):
  """Subtract each group's column mean: folds GroupNorm mean-removal into the weights."""
  k = w.shape[0]
  wg = w.reshape(k, GROUPS, GSIZE)
  return (wg - wg.mean(axis=-1, keepdims=True)).reshape(k, HIDDEN)


def edgeconv_forward(x, pos, src, dst, batch, num_graphs, params, *, edge_tile=None):
  f32, bf16 = jnp.float32, jnp.bfloat16
  n_nodes = x.shape[0]
  n_edges = src.shape[0]

  # ---- kernel 1: fused node / pos encoders -> feature [N, 64] (f32, exact) ----
  tn = n_nodes
  for cand in (512, 256, 128, 64, 32, 16, 8):
    if n_nodes % cand == 0:
      tn = cand
      break
  enc_inputs = (x, pos,
                params["we1"], params["be1"], params["we2"], params["be2"],
                params["we3"], params["be3"],
                params["wp1"], params["bp1"], params["wp2"], params["bp2"],
                params["wp3"], params["bp3"])
  enc_specs = ([pl.BlockSpec((tn, 1), lambda i: (i, 0)),
                pl.BlockSpec((tn, 4), lambda i: (i, 0))]
               + [_resident(a.shape) for a in enc_inputs[2:]])
  feature = pl.pallas_call(
      encoder_kernel,
      out_shape=jax.ShapeDtypeStruct((n_nodes, 64), f32),
      grid=(n_nodes // tn,),
      in_specs=enc_specs,
      out_specs=pl.BlockSpec((tn, 64), lambda i: (i, 0)),
      compiler_params=pltpu.CompilerParams(dimension_semantics=("parallel",)),
  )(*enc_inputs)

  # ---- kernel 2: edge-tiled EdgeConv MLP + add-aggregation + global max pool ----
  if edge_tile is None:
    edge_tile = min(256, max(8, -(-n_edges // 8) * 8))
  te = edge_tile
  e_pad = -(-n_edges // te) * te
  pad = e_pad - n_edges
  invalid = n_nodes  # padded edges: one-hot rows/cols are all-zero -> no contribution
  src_i = src.astype(jnp.int32)
  dst_i = dst.astype(jnp.int32)
  if pad:
    fill = jnp.full((pad,), invalid, jnp.int32)
    src_i = jnp.concatenate([src_i, fill])
    dst_i = jnp.concatenate([dst_i, fill])
  src_col = src_i.reshape(e_pad, 1)
  dst_col = dst_i.reshape(e_pad, 1)
  batch_row = batch.astype(jnp.int32).reshape(1, n_nodes)

  G = jax.nn.one_hot(jnp.arange(HIDDEN) // GSIZE, GROUPS, dtype=f32)   # [1024, 16]
  G_b = G.astype(bf16)
  Gt_b = G.T.astype(bf16)                                              # [16, 1024]

  # GroupNorm mean folded into the (bias-free) W1/W2 columns; bf16 weights on MXU.
  w1c = _center_group_columns(params["w1"]).astype(bf16)   # [128, 1024]
  w2c = _center_group_columns(params["w2"]).astype(bf16)   # [1024, 1024]
  w3 = params["w3"].astype(bf16)                           # [1024, 4]
  feature_b = feature.astype(bf16)                         # resident gather table

  edge_inputs = (feature_b, src_col, dst_col, batch_row,
                 w1c, params["g1"], params["bt1"],
                 w2c, params["g2"], params["bt2"],
                 w3, params["b3"], G_b, Gt_b)
  edge_specs = ([_resident(feature_b.shape),
                 pl.BlockSpec((te, 1), lambda t: (t, 0)),
                 pl.BlockSpec((te, 1), lambda t: (t, 0)),
                 _resident(batch_row.shape)]
                + [_resident(a.shape) for a in edge_inputs[4:]])

  q = pl.pallas_call(
      edgeconv_kernel,
      out_shape=jax.ShapeDtypeStruct((num_graphs, OUT_DIM), f32),
      grid=(e_pad // te,),
      in_specs=edge_specs,
      out_specs=_resident((num_graphs, OUT_DIM)),
      scratch_shapes=[pltpu.VMEM((OUT_DIM, n_nodes), f32),   # node accumulator [4, N]
                      pltpu.VMEM((te, 128), bf16)],          # packed cat([x_i, x_j-x_i])
      compiler_params=pltpu.CompilerParams(
          dimension_semantics=("arbitrary",),                # node-acc reduction axis
          vmem_limit_bytes=48 * 1024 * 1024),
  )(*edge_inputs)

  return {"q": q, "feature": feature}


# --------------------------- pure-JAX reference ----------------------------- #

def _gn_ref(h, gamma, beta):
  e = h.shape[0]
  hg = h.reshape(e, GROUPS, GSIZE)
  mean = hg.mean(-1, keepdims=True)
  var = hg.var(-1, keepdims=True)
  hn = (hg - mean) / jnp.sqrt(var + EPS)
  return hn.reshape(e, HIDDEN) * gamma + beta


def reference_forward(x, pos, src, dst, batch, num_graphs, params):
  p = params
  h = jax.nn.relu(x @ p["we1"] + p["be1"])
  h = jax.nn.relu(h @ p["we2"] + p["be2"])
  fx = h @ p["we3"] + p["be3"]
  hp = jax.nn.relu(pos @ p["wp1"] + p["bp1"])
  hp = jax.nn.relu(hp @ p["wp2"] + p["bp2"])
  fp = hp @ p["wp3"] + p["bp3"]
  feature = jnp.concatenate([fx, fp], axis=1)

  xi = feature[dst]
  xj = feature[src]
  e_in = jnp.concatenate([xi, xj - xi], axis=1)            # [E, 128]
  h = e_in @ p["w1"]
  h = jax.nn.relu(_gn_ref(h, p["g1"], p["bt1"]))
  h = h @ p["w2"]
  h = jax.nn.relu(_gn_ref(h, p["g2"], p["bt2"]))
  msg = h @ p["w3"] + p["b3"]
  node = jax.ops.segment_sum(msg, dst, num_segments=x.shape[0])
  q = jax.ops.segment_max(node, batch, num_segments=num_graphs)
  return {"q": q, "feature": feature}


# --------------------------------- main ------------------------------------ #

def init_params(key):
  f32 = jnp.float32
  ks = jax.random.split(key, 9)

  def w(k, shape, fan_in):
    return jax.random.normal(k, shape, dtype=f32) / np.sqrt(float(fan_in))

  z32 = jnp.zeros((1, 32), f32)
  return {
      "we1": w(ks[0], (1, 32), 1), "be1": z32,
      "we2": w(ks[1], (32, 32), 32), "be2": z32,
      "we3": w(ks[2], (32, 32), 32), "be3": z32,
      "wp1": w(ks[3], (4, 32), 4), "bp1": z32,
      "wp2": w(ks[4], (32, 32), 32), "bp2": z32,
      "wp3": w(ks[5], (32, 32), 32), "bp3": z32,
      "w1": w(ks[6], (128, HIDDEN), 128),
      "g1": jnp.ones((1, HIDDEN), f32), "bt1": jnp.zeros((1, HIDDEN), f32),
      "w2": w(ks[7], (HIDDEN, HIDDEN), HIDDEN),
      "g2": jnp.ones((1, HIDDEN), f32), "bt2": jnp.zeros((1, HIDDEN), f32),
      "w3": w(ks[8], (HIDDEN, OUT_DIM), HIDDEN),
      "b3": jnp.zeros((1, OUT_DIM), f32),  # Linear biases zeroed (reset_parameters)
  }


if __name__ == "__main__":
  key = jax.random.PRNGKey(0)
  k_param, k_x, k_pos, k_edge = jax.random.split(key, 4)

  num_graphs = 2
  nodes_per = 8
  edges_per = 16
  n_nodes = num_graphs * nodes_per            # 16
  n_edges = num_graphs * edges_per            # 32

  x = jax.random.normal(k_x, (n_nodes, 1), dtype=jnp.float32)
  pos = jax.random.normal(k_pos, (n_nodes, 4), dtype=jnp.float32)
  batch = jnp.repeat(jnp.arange(num_graphs, dtype=jnp.int32), nodes_per)

  # edges stay within each graph; edge_index[0]=src (j), edge_index[1]=dst (i)
  src_parts, dst_parts = [], []
  ek = jax.random.split(k_edge, 2 * num_graphs)
  for g in range(num_graphs):
    lo, hi = g * nodes_per, (g + 1) * nodes_per
    src_parts.append(jax.random.randint(ek[2 * g], (edges_per,), lo, hi, dtype=jnp.int32))
    dst_parts.append(jax.random.randint(ek[2 * g + 1], (edges_per,), lo, hi, dtype=jnp.int32))
  src = jnp.concatenate(src_parts)
  dst = jnp.concatenate(dst_parts)

  params = init_params(k_param)

  # edge_tile=16 -> 2 edge tiles, exercising the pipelined accumulation path
  out = edgeconv_forward(x, pos, src, dst, batch, num_graphs, params, edge_tile=16)
  jax.block_until_ready(out["q"])
  jax.block_until_ready(out["feature"])

  ref = reference_forward(x, pos, src, dst, batch, num_graphs, params)
  assert out["q"].shape == (num_graphs, OUT_DIM)
  assert out["feature"].shape == (n_nodes, 64)
  assert np.allclose(np.asarray(out["feature"]), np.asarray(ref["feature"]),
                     rtol=1e-2, atol=1e-2)
  assert np.allclose(np.asarray(out["q"]), np.asarray(ref["q"]),
                     rtol=5e-2, atol=5e-2)
  print("KERNEL_OK")
</pallas_src>

<mosaic_0001>
module attributes {stable_mosaic.version = 11 : i64} {
  func.func @encoder_kernel(%arg0: i32, %arg1: memref<16x1xf32, #tpu.memory_space<vmem>>, %arg2: memref<16x4xf32, #tpu.memory_space<vmem>>, %arg3: memref<1x32xf32, #tpu.memory_space<vmem>>, %arg4: memref<1x32xf32, #tpu.memory_space<vmem>>, %arg5: memref<32x32xf32, #tpu.memory_space<vmem>>, %arg6: memref<1x32xf32, #tpu.memory_space<vmem>>, %arg7: memref<32x32xf32, #tpu.memory_space<vmem>>, %arg8: memref<1x32xf32, #tpu.memory_space<vmem>>, %arg9: memref<4x32xf32, #tpu.memory_space<vmem>>, %arg10: memref<1x32xf32, #tpu.memory_space<vmem>>, %arg11: memref<32x32xf32, #tpu.memory_space<vmem>>, %arg12: memref<1x32xf32, #tpu.memory_space<vmem>>, %arg13: memref<32x32xf32, #tpu.memory_space<vmem>>, %arg14: memref<1x32xf32, #tpu.memory_space<vmem>>, %arg15: memref<16x64xf32, #tpu.memory_space<vmem>>) attributes {dimension_semantics = [#tpu.dimension_semantics<parallel>], iteration_bounds = array<i64: 1>, scalar_prefetch = 0 : i64, scratch_operands = 0 : i64, tpu.core_type = #tpu.core_type<tc>, window_params = [{transform_indices = @transform_0, window_bounds = array<i64: 16, 1>}, {transform_indices = @transform_1, window_bounds = array<i64: 16, 4>}, {pipeline_mode = #tpu.pipeline_mode<synchronous>, transform_indices = @transform_2, window_bounds = array<i64: 1, 32>}, {pipeline_mode = #tpu.pipeline_mode<synchronous>, transform_indices = @transform_3, window_bounds = array<i64: 1, 32>}, {pipeline_mode = #tpu.pipeline_mode<synchronous>, transform_indices = @transform_4, window_bounds = array<i64: 32, 32>}, {pipeline_mode = #tpu.pipeline_mode<synchronous>, transform_indices = @transform_5, window_bounds = array<i64: 1, 32>}, {pipeline_mode = #tpu.pipeline_mode<synchronous>, transform_indices = @transform_6, window_bounds = array<i64: 32, 32>}, {pipeline_mode = #tpu.pipeline_mode<synchronous>, transform_indices = @transform_7, window_bounds = array<i64: 1, 32>}, {pipeline_mode = #tpu.pipeline_mode<synchronous>, transform_indices = @transform_8, window_bounds = array<i64: 4, 32>}, {pipeline_mode = #tpu.pipeline_mode<synchronous>, transform_indices = @transform_9, window_bounds = array<i64: 1, 32>}, {pipeline_mode = #tpu.pipeline_mode<synchronous>, transform_indices = @transform_10, window_bounds = array<i64: 32, 32>}, {pipeline_mode = #tpu.pipeline_mode<synchronous>, transform_indices = @transform_11, window_bounds = array<i64: 1, 32>}, {pipeline_mode = #tpu.pipeline_mode<synchronous>, transform_indices = @transform_12, window_bounds = array<i64: 32, 32>}, {pipeline_mode = #tpu.pipeline_mode<synchronous>, transform_indices = @transform_13, window_bounds = array<i64: 1, 32>}, {transform_indices = @transform_14, window_bounds = array<i64: 16, 64>}]} {
    %c0 = arith.constant 0 : index
    %c0_0 = arith.constant 0 : index
    %0 = vector.load %arg1[%c0, %c0_0] : memref<16x1xf32, #tpu.memory_space<vmem>>, vector<16x1xf32>
    %c0_1 = arith.constant 0 : index
    %c0_2 = arith.constant 0 : index
    %1 = vector.load %arg3[%c0_1, %c0_2] : memref<1x32xf32, #tpu.memory_space<vmem>>, vector<1x32xf32>
    %2 = vector.broadcast %0 : vector<16x1xf32> to vector<16x32xf32>
    %3 = vector.broadcast %1 : vector<1x32xf32> to vector<16x32xf32>
    %4 = arith.mulf %2, %3 : vector<16x32xf32>
    %c0_3 = arith.constant 0 : index
    %c0_4 = arith.constant 0 : index
    %5 = vector.load %arg4[%c0_3, %c0_4] : memref<1x32xf32, #tpu.memory_space<vmem>>, vector<1x32xf32>
    %6 = vector.broadcast %5 : vector<1x32xf32> to vector<16x32xf32>
    %7 = arith.addf %4, %6 : vector<16x32xf32>
    %cst = arith.constant 0.000000e+00 : f32
    %8 = vector.broadcast %cst : f32 to vector<16x32xf32>
    %9 = arith.maximumf %7, %8 : vector<16x32xf32>
    %c0_5 = arith.constant 0 : index
    %c0_6 = arith.constant 0 : index
    %10 = vector.load %arg5[%c0_5, %c0_6] : memref<32x32xf32, #tpu.memory_space<vmem>>, vector<32x32xf32>
    %cst_7 = arith.constant dense<0.000000e+00> : vector<16x32xf32>
    %11 = tpu.matmul %9, %10, %cst_7 {dimension_numbers = #tpu.dot_dimension_numbers<[1], [0], [0], [1], [0, 0, 1, 1], [], []>} : vector<16x32xf32>, vector<32x32xf32>, vector<16x32xf32> -> vector<16x32xf32>
    %c0_8 = arith.constant 0 : index
    %c0_9 = arith.constant 0 : index
    %12 = vector.load %arg6[%c0_8, %c0_9] : memref<1x32xf32, #tpu.memory_space<vmem>>, vector<1x32xf32>
    %13 = vector.broadcast %12 : vector<1x32xf32> to vector<16x32xf32>
    %14 = arith.addf %11, %13 : vector<16x32xf32>
    %cst_10 = arith.constant 0.000000e+00 : f32
    %15 = vector.broadcast %cst_10 : f32 to vector<16x32xf32>
    %16 = arith.maximumf %14, %15 : vector<16x32xf32>
    %c0_11 = arith.constant 0 : index
    %c0_12 = arith.constant 0 : index
    %17 = vector.load %arg7[%c0_11, %c0_12] : memref<32x32xf32, #tpu.memory_space<vmem>>, vector<32x32xf32>
    %cst_13 = arith.constant dense<0.000000e+00> : vector<16x32xf32>
    %18 = tpu.matmul %16, %17, %cst_13 {dimension_numbers = #tpu.dot_dimension_numbers<[1], [0], [0], [1], [0, 0, 1, 1], [], []>} : vector<16x32xf32>, vector<32x32xf32>, vector<16x32xf32> -> vector<16x32xf32>
    %c0_14 = arith.constant 0 : index
    %c0_15 = arith.constant 0 : index
    %19 = vector.load %arg8[%c0_14, %c0_15] : memref<1x32xf32, #tpu.memory_space<vmem>>, vector<1x32xf32>
    %20 = vector.broadcast %19 : vector<1x32xf32> to vector<16x32xf32>
    %21 = arith.addf %18, %20 : vector<16x32xf32>
    %c0_16 = arith.constant 0 : index
    %c0_17 = arith.constant 0 : index
    %22 = vector.load %arg15[%c0_16, %c0_17] : memref<16x64xf32, #tpu.memory_space<vmem>>, vector<16x32xf32>
    tpu.vector_store %arg15[%c0_16, %c0_17], %21 {strides = array<i32>} : memref<16x64xf32, #tpu.memory_space<vmem>>, vector<16x32xf32>,
    %c0_18 = arith.constant 0 : index
    %c0_19 = arith.constant 0 : index
    %23 = vector.load %arg2[%c0_18, %c0_19] : memref<16x4xf32, #tpu.memory_space<vmem>>, vector<16x4xf32>
    %c0_20 = arith.constant 0 : index
    %c0_21 = arith.constant 0 : index
    %24 = vector.load %arg9[%c0_20, %c0_21] : memref<4x32xf32, #tpu.memory_space<vmem>>, vector<4x32xf32>
    %25 = vector.extract_strided_slice %23 {offsets = [0, 0], sizes = [16, 1], strides = [1, 1]} : vector<16x4xf32> to vector<16x1xf32>
    %26 = vector.extract_strided_slice %24 {offsets = [0, 0], sizes = [1, 32], strides = [1, 1]} : vector<4x32xf32> to vector<1x32xf32>
    %27 = vector.broadcast %25 : vector<16x1xf32> to vector<16x32xf32>
    %28 = vector.broadcast %26 : vector<1x32xf32> to vector<16x32xf32>
    %29 = arith.mulf %27, %28 : vector<16x32xf32>
    %30 = vector.extract_strided_slice %23 {offsets = [0, 1], sizes = [16, 1], strides = [1, 1]} : vector<16x4xf32> to vector<16x1xf32>
    %31 = vector.extract_strided_slice %24 {offsets = [1, 0], sizes = [1, 32], strides = [1, 1]} : vector<4x32xf32> to vector<1x32xf32>
    %32 = vector.broadcast %30 : vector<16x1xf32> to vector<16x32xf32>
    %33 = vector.broadcast %31 : vector<1x32xf32> to vector<16x32xf32>
    %34 = arith.mulf %32, %33 : vector<16x32xf32>
    %35 = arith.addf %29, %34 : vector<16x32xf32>
    %36 = vector.extract_strided_slice %23 {offsets = [0, 2], sizes = [16, 1], strides = [1, 1]} : vector<16x4xf32> to vector<16x1xf32>
    %37 = vector.extract_strided_slice %24 {offsets = [2, 0], sizes = [1, 32], strides = [1, 1]} : vector<4x32xf32> to vector<1x32xf32>
    %38 = vector.broadcast %36 : vector<16x1xf32> to vector<16x32xf32>
    %39 = vector.broadcast %37 : vector<1x32xf32> to vector<16x32xf32>
    %40 = arith.mulf %38, %39 : vector<16x32xf32>
    %41 = arith.addf %35, %40 : vector<16x32xf32>
    %42 = vector.extract_strided_slice %23 {offsets = [0, 3], sizes = [16, 1], strides = [1, 1]} : vector<16x4xf32> to vector<16x1xf32>
    %43 = vector.extract_strided_slice %24 {offsets = [3, 0], sizes = [1, 32], strides = [1, 1]} : vector<4x32xf32> to vector<1x32xf32>
    %44 = vector.broadcast %42 : vector<16x1xf32> to vector<16x32xf32>
    %45 = vector.broadcast %43 : vector<1x32xf32> to vector<16x32xf32>
    %46 = arith.mulf %44, %45 : vector<16x32xf32>
    %47 = arith.addf %41, %46 : vector<16x32xf32>
    %c0_22 = arith.constant 0 : index
    %c0_23 = arith.constant 0 : index
    %48 = vector.load %arg10[%c0_22, %c0_23] : memref<1x32xf32, #tpu.memory_space<vmem>>, vector<1x32xf32>
    %49 = vector.broadcast %48 : vector<1x32xf32> to vector<16x32xf32>
    %50 = arith.addf %47, %49 : vector<16x32xf32>
    %cst_24 = arith.constant 0.000000e+00 : f32
    %51 = vector.broadcast %cst_24 : f32 to vector<16x32xf32>
    %52 = arith.maximumf %50, %51 : vector<16x32xf32>
    %c0_25 = arith.constant 0 : index
    %c0_26 = arith.constant 0 : index
    %53 = vector.load %arg11[%c0_25, %c0_26] : memref<32x32xf32, #tpu.memory_space<vmem>>, vector<32x32xf32>
    %cst_27 = arith.constant dense<0.000000e+00> : vector<16x32xf32>
    %54 = tpu.matmul %52, %53, %cst_27 {dimension_numbers = #tpu.dot_dimension_numbers<[1], [0], [0], [1], [0, 0, 1, 1], [], []>} : vector<16x32xf32>, vector<32x32xf32>, vector<16x32xf32> -> vector<16x32xf32>
    %c0_28 = arith.constant 0 : index
    %c0_29 = arith.constant 0 : index
    %55 = vector.load %arg12[%c0_28, %c0_29] : memref<1x32xf32, #tpu.memory_space<vmem>>, vector<1x32xf32>
    %56 = vector.broadcast %55 : vector<1x32xf32> to vector<16x32xf32>
    %57 = arith.addf %54, %56 : vector<16x32xf32>
    %cst_30 = arith.constant 0.000000e+00 : f32
    %58 = vector.broadcast %cst_30 : f32 to vector<16x32xf32>
    %59 = arith.maximumf %57, %58 : vector<16x32xf32>
    %c0_31 = arith.constant 0 : index
    %c0_32 = arith.constant 0 : index
    %60 = vector.load %arg13[%c0_31, %c0_32] : memref<32x32xf32, #tpu.memory_space<vmem>>, vector<32x32xf32>
    %cst_33 = arith.constant dense<0.000000e+00> : vector<16x32xf32>
    %61 = tpu.matmul %59, %60, %cst_33 {dimension_numbers = #tpu.dot_dimension_numbers<[1], [0], [0], [1], [0, 0, 1, 1], [], []>} : vector<16x32xf32>, vector<32x32xf32>, vector<16x32xf32> -> vector<16x32xf32>
    %c0_34 = arith.constant 0 : index
    %c0_35 = arith.constant 0 : index
    %62 = vector.load %arg14[%c0_34, %c0_35] : memref<1x32xf32, #tpu.memory_space<vmem>>, vector<1x32xf32>
    %63 = vector.broadcast %62 : vector<1x32xf32> to vector<16x32xf32>
    %64 = arith.addf %61, %63 : vector<16x32xf32>
    %c0_36 = arith.constant 0 : index
    %c32 = arith.constant 32 : index
    %65 = vector.load %arg15[%c0_36, %c32] : memref<16x64xf32, #tpu.memory_space<vmem>>, vector<16x32xf32>
    tpu.vector_store %arg15[%c0_36, %c32], %64 {strides = array<i32>} : memref<16x64xf32, #tpu.memory_space<vmem>>, vector<16x32xf32>,
    return
  }
  func.func @transform_0(%arg0: i32) -> (i32, i32) {
    %c0_i32 = arith.constant 0 : i32
    %c0_i32_0 = arith.constant 0 : i32
    return %arg0, %c0_i32 : i32, i32
  }
  func.func @transform_1(%arg0: i32) -> (i32, i32) {
    %c0_i32 = arith.constant 0 : i32
    %c0_i32_0 = arith.constant 0 : i32
    return %arg0, %c0_i32 : i32, i32
  }
  func.func @transform_2(%arg0: i32) -> (i32, i32) {
    %c0_i32 = arith.constant 0 : i32
    %c0_i32_0 = arith.constant 0 : i32
    %c0_i32_1 = arith.constant 0 : i32
    return %c0_i32, %c0_i32_0 : i32, i32
  }
  func.func @transform_3(%arg0: i32) -> (i32, i32) {
    %c0_i32 = arith.constant 0 : i32
    %c0_i32_0 = arith.constant 0 : i32
    %c0_i32_1 = arith.constant 0 : i32
    return %c0_i32, %c0_i32_0 : i32, i32
  }
  func.func @transform_4(%arg0: i32) -> (i32, i32) {
    %c0_i32 = arith.constant 0 : i32
    %c0_i32_0 = arith.constant 0 : i32
    %c0_i32_1 = arith.constant 0 : i32
    return %c0_i32, %c0_i32_0 : i32, i32
  }
  func.func @transform_5(%arg0: i32) -> (i32, i32) {
    %c0_i32 = arith.constant 0 : i32
    %c0_i32_0 = arith.constant 0 : i32
    %c0_i32_1 = arith.constant 0 : i32
    return %c0_i32, %c0_i32_0 : i32, i32
  }
  func.func @transform_6(%arg0: i32) -> (i32, i32) {
    %c0_i32 = arith.constant 0 : i32
    %c0_i32_0 = arith.constant 0 : i32
    %c0_i32_1 = arith.constant 0 : i32
    return %c0_i32, %c0_i32_0 : i32, i32
  }
  func.func @transform_7(%arg0: i32) -> (i32, i32) {
    %c0_i32 = arith.constant 0 : i32
    %c0_i32_0 = arith.constant 0 : i32
    %c0_i32_1 = arith.constant 0 : i32
    return %c0_i32, %c0_i32_0 : i32, i32
  }
  func.func @transform_8(%arg0: i32) -> (i32, i32) {
    %c0_i32 = arith.constant 0 : i32
    %c0_i32_0 = arith.constant 0 : i32
    %c0_i32_1 = arith.constant 0 : i32
    return %c0_i32, %c0_i32_0 : i32, i32
  }
  func.func @transform_9(%arg0: i32) -> (i32, i32) {
    %c0_i32 = arith.constant 0 : i32
    %c0_i32_0 = arith.constant 0 : i32
    %c0_i32_1 = arith.constant 0 : i32
    return %c0_i32, %c0_i32_0 : i32, i32
  }
  func.func @transform_10(%arg0: i32) -> (i32, i32) {
    %c0_i32 = arith.constant 0 : i32
    %c0_i32_0 = arith.constant 0 : i32
    %c0_i32_1 = arith.constant 0 : i32
    return %c0_i32, %c0_i32_0 : i32, i32
  }
  func.func @transform_11(%arg0: i32) -> (i32, i32) {
    %c0_i32 = arith.constant 0 : i32
    %c0_i32_0 = arith.constant 0 : i32
    %c0_i32_1 = arith.constant 0 : i32
    return %c0_i32, %c0_i32_0 : i32, i32
  }
  func.func @transform_12(%arg0: i32) -> (i32, i32) {
    %c0_i32 = arith.constant 0 : i32
    %c0_i32_0 = arith.constant 0 : i32
    %c0_i32_1 = arith.constant 0 : i32
    return %c0_i32, %c0_i32_0 : i32, i32
  }
  func.func @transform_13(%arg0: i32) -> (i32, i32) {
    %c0_i32 = arith.constant 0 : i32
    %c0_i32_0 = arith.constant 0 : i32
    %c0_i32_1 = arith.constant 0 : i32
    return %c0_i32, %c0_i32_0 : i32, i32
  }
  func.func @transform_14(%arg0: i32) -> (i32, i32) {
    %c0_i32 = arith.constant 0 : i32
    %c0_i32_0 = arith.constant 0 : i32
    return %arg0, %c0_i32 : i32, i32
  }
}

</mosaic_0001>

<llo_original>
// kernel: tpu_custom_call.1
$region0: #{tpu_custom_call.1}
  #allocation0 [shape = 'u32[]', space=smem, size = 0x4, offset = 0x4, fixed_abs, tag = 'smem constant byte address 0x4 - core index']
  #allocation1 [shape = 'u32[144,128]{1,0:T(1,128)}', space=vmem, size = 0x12000, scoped, tag = 'internal scratch']
  %s0 = inlined_call_operand.vmem [shape: f32[16,1], index: 0, kind: input, shape index: {}]
  %s1 = inlined_call_operand.vmem [shape: f32[16,4], index: 1, kind: input, shape index: {}]
  %s2 = inlined_call_operand.vmem [shape: f32[1,32], index: 2, kind: input, shape index: {}]
  %s3 = inlined_call_operand.vmem [shape: f32[1,32], index: 3, kind: input, shape index: {}]
  %s4 = inlined_call_operand.vmem [shape: f32[32,32], index: 4, kind: input, shape index: {}]
  %s5 = inlined_call_operand.vmem [shape: f32[1,32], index: 5, kind: input, shape index: {}]
  %s6 = inlined_call_operand.hbm [shape: f32[32,32], index: 6, kind: input, shape index: {}]
  %s7 = inlined_call_operand.hbm [shape: f32[1,32], index: 7, kind: input, shape index: {}]
  %s8 = inlined_call_operand.hbm [shape: f32[4,32], index: 8, kind: input, shape index: {}]
  %s9 = inlined_call_operand.vmem [shape: f32[1,32], index: 9, kind: input, shape index: {}]
  %s10 = inlined_call_operand.vmem [shape: f32[32,32], index: 10, kind: input, shape index: {}]
  %s11 = inlined_call_operand.vmem [shape: f32[1,32], index: 11, kind: input, shape index: {}]
  %s12 = inlined_call_operand.hbm [shape: f32[32,32], index: 12, kind: input, shape index: {}]
  %s13 = inlined_call_operand.vmem [shape: f32[1,32], index: 13, kind: input, shape index: {}]
  %s14 = inlined_call_operand.hbm [shape: f32[16,64], index: 14, kind: output, shape index: {}]
  %s15 = sld [smem:[#allocation0]]
  $region82: #{tpu_custom_call.1} parent=0
    _
  %s17 = ssub.s32 1, %s15
  %s18 = scalar_select 0, %s17, %s15
  $region1: #{tpu_custom_call.1} parent=0
    #allocation2 [shape = 'u8[16384]{0}', space=vmem, size = 0x4000, scoped, tag = 'input window, operand 6, single buffered']
    #allocation3 [shape = 's32[1]{0}', space=sflag, size = 0x4, scoped, tag = 'scoped memory for tpu_custom_call.1']
    #allocation4 [shape = 's32[1]{0}', space=sflag, size = 0x4, scoped, tag = 'scoped memory for tpu_custom_call.1']
    #allocation5 [shape = 'u8[512]{0}', space=vmem, size = 0x400, scoped, tag = 'input window, operand 7, single buffered']
    #allocation6 [shape = 's32[1]{0}', space=sflag, size = 0x4, scoped, tag = 'scoped memory for tpu_custom_call.1']
    #allocation7 [shape = 'u8[2048]{0}', space=vmem, size = 0x800, scoped, tag = 'input window, operand 8, single buffered']
    #allocation8 [shape = 'u8[16384]{0}', space=vmem, size = 0x4000, scoped, tag = 'input window, operand 12, single buffered']
    #allocation9 [shape = 's32[1]{0}', space=sflag, size = 0x4, scoped, tag = 'scoped memory for tpu_custom_call.1']
    #allocation10 [shape = 'u8[8192]{0}', space=vmem, size = 0x2000, scoped, tag = 'output window, operand 0, single buffered']
    %19 = vsyncpa [#allocation3], 0
    %20 = vsyncpa [#allocation6], 0
    %21 = vsyncpa [#allocation9], 0
    %22 = vsyncpa [#allocation4], 0
    // Predicated region
    $region2: #{tpu_custom_call.1} parent=1 // pred_check
      _
    $region3: #{tpu_custom_call.1} parent=1 // pred_check_branch
      %24 = sbr.rel (0) target = $region5
    $region4: #{tpu_custom_call.1} parent=1 // pred_region
      _
    $region5: #{tpu_custom_call.1} parent=1 // pred_fallthru
      _
    // Predicated region
    $region6: #{tpu_custom_call.1} parent=1 // pred_check
      _
    $region7: #{tpu_custom_call.1} parent=1 // pred_check_branch
      %26 = sbr.rel (0) target = $region9
    $region8: #{tpu_custom_call.1} parent=1 // pred_region
      _
    $region9: #{tpu_custom_call.1} parent=1 // pred_fallthru
      _
    // Predicated region
    $region10: #{tpu_custom_call.1} parent=1 // pred_check
      _
    $region11: #{tpu_custom_call.1} parent=1 // pred_check_branch
      %28 = sbr.rel (0) target = $region13
    $region12: #{tpu_custom_call.1} parent=1 // pred_region
      _
    $region13: #{tpu_custom_call.1} parent=1 // pred_fallthru
      _
    // Predicated region
    $region14: #{tpu_custom_call.1} parent=1 // pred_check
      _
    $region15: #{tpu_custom_call.1} parent=1 // pred_check_branch
      %30 = sbr.rel (0) target = $region17
    $region16: #{tpu_custom_call.1} parent=1 // pred_region
      _
    $region17: #{tpu_custom_call.1} parent=1 // pred_fallthru
      _
    // Predicated region
    $region18: #{tpu_custom_call.1} parent=1 // pred_check
      _
    $region19: #{tpu_custom_call.1} parent=1 // pred_check_branch
      %32 = sbr.rel (0) target = $region21
    $region20: #{tpu_custom_call.1} parent=1 // pred_region
      _
    $region21: #{tpu_custom_call.1} parent=1 // pred_fallthru
      _
    // Predicated region
    $region22: #{tpu_custom_call.1} parent=1 // pred_check
      _
    $region23: #{tpu_custom_call.1} parent=1 // pred_check_branch
      %34 = sbr.rel (0) target = $region25
    $region24: #{tpu_custom_call.1} parent=1 // pred_region
      _
    $region25: #{tpu_custom_call.1} parent=1 // pred_fallthru
      _
    // Predicated region
    $region26: #{tpu_custom_call.1} parent=1 // pred_check
      _
    $region27: #{tpu_custom_call.1} parent=1 // pred_check_branch
      %36 = sbr.rel (0) target = $region29
    $region28: #{tpu_custom_call.1} parent=1 // pred_region
      %s38 = ssub.s32 512, 512
      %39 = vsyncadd [#allocation3], %s38
      %s40 = sshll.u32 [#allocation2], 4
      %s41 = int_to_ptr.vmem [resolvable:$true] %s40
      %46 = dma.hbm_to_vmem [thread:$0]  %s6, 512, %s41, [#allocation3], 128, 128, 8
    $region29: #{tpu_custom_call.1} parent=1 // pred_fallthru
      _
    // Predicated region
    $region30: #{tpu_custom_call.1} parent=1 // pred_check
      _
    $region31: #{tpu_custom_call.1} parent=1 // pred_check_branch
      %48 = sbr.rel (0) target = $region33
    $region32: #{tpu_custom_call.1} parent=1 // pred_region
      %s50 = ssub.s32 16, 16
      %51 = vsyncadd [#allocation6], %s50
      %s53 = sshll.u32 [#allocation5], 4
      %s54 = int_to_ptr.vmem [resolvable:$true] %s53
      %56 = dma.hbm_to_vmem [thread:$0]  %s7, 16, %s54, [#allocation6]
    $region33: #{tpu_custom_call.1} parent=1 // pred_fallthru
      _
    // Predicated region
    $region34: #{tpu_custom_call.1} parent=1 // pred_check
      _
    $region35: #{tpu_custom_call.1} parent=1 // pred_check_branch
      %58 = sbr.rel (0) target = $region37
    $region36: #{tpu_custom_call.1} parent=1 // pred_region
      %s60 = ssub.s32 64, 64
      %61 = vsyncadd [#allocation6], %s60
      %s63 = sshll.u32 [#allocation7], 4
      %s64 = int_to_ptr.vmem [resolvable:$true] %s63
      %66 = dma.hbm_to_vmem [thread:$0]  %s8, 64, %s64, [#allocation6]
    $region37: #{tpu_custom_call.1} parent=1 // pred_fallthru
      _
    // Predicated region
    $region38: #{tpu_custom_call.1} parent=1 // pred_check
      _
    $region39: #{tpu_custom_call.1} parent=1 // pred_check_branch
      %68 = sbr.rel (0) target = $region41
    $region40: #{tpu_custom_call.1} parent=1 // pred_region
      _
    $region41: #{tpu_custom_call.1} parent=1 // pred_fallthru
      _
    // Predicated region
    $region42: #{tpu_custom_call.1} parent=1 // pred_check
      _
    $region43: #{tpu_custom_call.1} parent=1 // pred_check_branch
      %70 = sbr.rel (0) target = $region45
    $region44: #{tpu_custom_call.1} parent=1 // pred_region
      _
    $region45: #{tpu_custom_call.1} parent=1 // pred_fallthru
      _
    // Predicated region
    $region46: #{tpu_custom_call.1} parent=1 // pred_check
      _
    $region47: #{tpu_custom_call.1} parent=1 // pred_check_branch
      %72 = sbr.rel (0) target = $region49
    $region48: #{tpu_custom_call.1} parent=1 // pred_region
      _
    $region49: #{tpu_custom_call.1} parent=1 // pred_fallthru
      _
    // Predicated region
    $region50: #{tpu_custom_call.1} parent=1 // pred_check
      _
    $region51: #{tpu_custom_call.1} parent=1 // pred_check_branch
      %74 = sbr.rel (0) target = $region53
    $region52: #{tpu_custom_call.1} parent=1 // pred_region
      %s76 = ssub.s32 512, 512
      %77 = vsyncadd [#allocation9], %s76
      %s78 = sshll.u32 [#allocation8], 4
      %s79 = int_to_ptr.vmem [resolvable:$true] %s78
      %84 = dma.hbm_to_vmem [thread:$0]  %s12, 512, %s79, [#allocation9], 128, 128, 8
    $region53: #{tpu_custom_call.1} parent=1 // pred_fallthru
      _
    // Predicated region
    $region54: #{tpu_custom_call.1} parent=1 // pred_check
      _
    $region55: #{tpu_custom_call.1} parent=1 // pred_check_branch
      %86 = sbr.rel (0) target = $region57
    $region56: #{tpu_custom_call.1} parent=1 // pred_region
      _
    $region57: #{tpu_custom_call.1} parent=1 // pred_fallthru
      _
    // Predicated region
    $region58: #{tpu_custom_call.1} parent=1 // pred_check
      _
    $region59: #{tpu_custom_call.1} parent=1 // pred_check_branch
      %88 = sbr.rel (0) target = $region61
    $region60: #{tpu_custom_call.1} parent=1 // pred_region
      %89 = dma.done [#allocation3], 512
    $region61: #{tpu_custom_call.1} parent=1 // pred_fallthru
      _
    // Predicated region
    $region62: #{tpu_custom_call.1} parent=1 // pred_check
      _
    $region63: #{tpu_custom_call.1} parent=1 // pred_check_branch
      %91 = sbr.rel (0) target = $region65
    $region64: #{tpu_custom_call.1} parent=1 // pred_region
      %92 = dma.done [#allocation6], 16
    $region65: #{tpu_custom_call.1} parent=1 // pred_fallthru
      _
    // Predicated region
    $region66: #{tpu_custom_call.1} parent=1 // pred_check
      _
    $region67: #{tpu_custom_call.1} parent=1 // pred_check_branch
      %94 = sbr.rel (0) target = $region69
    $region68: #{tpu_custom_call.1} parent=1 // pred_region
      %95 = dma.done [#allocation6], 64
    $region69: #{tpu_custom_call.1} parent=1 // pred_fallthru
      _
    // Predicated region
    $region70: #{tpu_custom_call.1} parent=1 // pred_check
      _
    $region71: #{tpu_custom_call.1} parent=1 // pred_check_branch
      %97 = sbr.rel (0) target = $region73
    $region72: #{tpu_custom_call.1} parent=1 // pred_region
      %98 = dma.done [#allocation9], 512
    $region73: #{tpu_custom_call.1} parent=1 // pred_fallthru
      _
    %v99 = vld [vmem:[%s0] sm:$0xff]
    %v100 = vld [vmem:[%s0 + $0x8] sm:$0xff]
    %v101 = vld [vmem:[%s2] sm:$0x1]
    %103 = vset.pattern.permute.xlu0 0
    %104 = vperm.xlu0 %103, %v99
    %v105 = vpop.permute.xlu0 %104
    %108 = vset.pattern.permute.xlu0 0
    %109 = vperm.xlu0 %108, %v100
    %v110 = vpop.permute.xlu0 %109
    %v113 = vlaneseq
    %v114 = vshrl.u32 %v113, 7
    %v115 = vsub.s32 0, %v114
    %v116 = vrot.slane %v101, %v115
    %v118 = vmul.f32 %v105, %v116
    %v119 = vmul.f32 %v110, %v116
    %v120 = vld [vmem:[%s3] sm:$0x1]
    %v122 = vlaneseq
    %v123 = vshrl.u32 %v122, 7
    %v124 = vsub.s32 0, %v123
    %v125 = vrot.slane %v120, %v124
    %v127 = vadd.f32 %v118, %v125
    %v128 = vadd.f32 %v119, %v125
    %v129 = vmax.f32 %v127, 0.0
    %v130 = vmax.f32 %v128, 0.0
    %v131 = vld [vmem:[%s4] sm:$0xff]
    %v132 = vld [vmem:[%s4 + $0x8] sm:$0xff]
    %v133 = vld [vmem:[%s4 + $0x10] sm:$0xff]
    %v134 = vld [vmem:[%s4 + $0x18] sm:$0xff]
    %v135 = vld [vmem:[%s5] sm:$0x1]
    %v137 = vlaneseq
    %v138 = vshrl.u32 %v137, 7
    %v139 = vsub.s32 0, %v138
    %v140 = vrot.slane %v135, %v139
    %vm142 = vcmask 261120
    %v144 = vsel %vm142, %v129, 0
    %v147 = vsel %vm142, %v130, 0
    %149 = vmatprep.subr.mxu0 0.0
    %150 = vmatpush1.msra.mxu0 %v131
    %151 = vmatprep.subr.mxu0 0.0
    %152 = vmatpush1.msra.mxu0 %v132
    %153 = vmatprep.subr.mxu0 0.0
    %154 = vmatpush1.msra.mxu0 %v133
    %155 = vmatprep.subr.mxu0 0.0
    %156 = vmatpush1.msra.mxu0 %v134
    %157 = vmatprep.subr.mxu0 0.0
    %158 = vmatpush1.msra.mxu0 0.0
    %159 = vmatprep.subr.mxu0 0.0
    %160 = vmatpush1.msra.mxu0 0.0
    %161 = vmatprep.subr.mxu0 0.0
    %162 = vmatpush1.msra.mxu0 0.0
    %163 = vmatprep.subr.mxu0 0.0
    %164 = vmatpush1.msra.mxu0 0.0
    %165 = vmatprep.subr.mxu0 0.0
    %166 = vmatpush1.msra.mxu0 0.0
    %167 = vmatprep.subr.mxu0 0.0
    %168 = vmatpush1.msra.mxu0 0.0
    %169 = vmatprep.subr.mxu0 0.0
    %170 = vmatpush1.msra.mxu0 0.0
    %171 = vmatprep.subr.mxu0 0.0
    %172 = vmatpush1.msra.mxu0 0.0
    %173 = vmatprep.subr.mxu0 0.0
    %174 = vmatpush1.msra.mxu0 0.0
    %175 = vmatprep.subr.mxu0 0.0
    %176 = vmatpush1.msra.mxu0 0.0
    %177 = vmatprep.subr.mxu0 0.0
    %178 = vmatpush1.msra.mxu0 0.0
    %179 = vmatprep.subr.mxu0 0.0
    %180 = vmatpush1.msra.mxu0 0.0
    %181 = vmatprep.subr.mxu0 0.0
    %182 = vmatpush1.msra.mxu0 0.0
    %183 = vmatprep.subr.mxu0 0.0
    %184 = vmatpush1.msra.mxu0 0.0
    %185 = vmatprep.subr.mxu0 0.0
    %186 = vmatpush1.msra.mxu0 0.0
    %187 = vmatprep.subr.mxu0 0.0
    %188 = vmatpush1.msra.mxu0 0.0
    %189 = vmatprep.subr.mxu0 0.0
    %190 = vmatpush1.msra.mxu0 0.0
    %191 = vmatprep.subr.mxu0 0.0
    %192 = vmatpush1.msra.mxu0 0.0
    %193 = vmatprep.subr.mxu0 0.0
    %194 = vmatpush1.msra.mxu0 0.0
    %195 = vmatprep.subr.mxu0 0.0
    %196 = vmatpush1.msra.mxu0 0.0
    %197 = vmatprep.subr.mxu0 0.0
    %198 = vmatpush1.msra.mxu0 0.0
    %199 = vmatprep.subr.mxu0 0.0
    %200 = vmatpush1.msra.mxu0 0.0
    %201 = vmatprep.subr.mxu0 0.0
    %202 = vmatpush1.msra.mxu0 0.0
    %203 = vmatprep.subr.mxu0 0.0
    %204 = vmatpush1.msra.mxu0 0.0
    %205 = vmatprep.subr.mxu0 0.0
    %206 = vmatpush1.msra.mxu0 0.0
    %207 = vmatprep.subr.mxu0 0.0
    %208 = vmatpush1.msra.mxu0 0.0
    %209 = vmatprep.subr.mxu0 0.0
    %210 = vmatpush1.msra.mxu0 0.0
    %211 = vmatprep.subr.mxu0 0.0
    %212 = vmatpush1.msra.mxu0 0.0
    %213 = vmatprep.mubr.f32.mxu0 0.0
    %214 = vmatmul.mubr.f32.gmra.mrb[0].mxu0 %v144
    %v215 = vpop.f32.mrb[0].mxu0
    %v216 = vadd.f32 %v140, %v215
    %v217 = vpop.f32.mrb[0].mxu0
    %218 = vmatprep.mubr.f32.mxu0 0.0
    %219 = vmatmul.mubr.f32.gmra.mrb[0].mxu0 %v147
    %v220 = vpop.f32.mrb[0].mxu0
    %v221 = vadd.f32 %v140, %v220
    %v222 = vpop.f32.mrb[0].mxu0
    %223 = vdwg.mxu0
    %v224 = vmax.f32 %v216, 0.0
    %v225 = vmax.f32 %v221, 0.0
    %v226 = vld [vmem:[#allocation2] sm:$0xff]
    %v227 = vld [vmem:[#allocation2 + $0x8] sm:$0xff]
    %v228 = vld [vmem:[#allocation2 + $0x10] sm:$0xff]
    %v229 = vld [vmem:[#allocation2 + $0x18] sm:$0xff]
    %v230 = vld [vmem:[#allocation5] sm:$0x1]
    %v232 = vlaneseq
    %v233 = vshrl.u32 %v232, 7
    %v234 = vsub.s32 0, %v233
    %v235 = vrot.slane %v230, %v234
    %v238 = vsel %vm142, %v224, 0
    %v241 = vsel %vm142, %v225, 0
    %243 = vmatprep.subr.mxu0 0.0
    %244 = vmatpush1.msra.mxu0 %v226
    %245 = vmatprep.subr.mxu0 0.0
    %246 = vmatpush1.msra.mxu0 %v227
    %247 = vmatprep.subr.mxu0 0.0
    %248 = vmatpush1.msra.mxu0 %v228
    %249 = vmatprep.subr.mxu0 0.0
    %250 = vmatpush1.msra.mxu0 %v229
    %251 = vmatprep.subr.mxu0 0.0
    %252 = vmatpush1.msra.mxu0 0.0
    %253 = vmatprep.subr.mxu0 0.0
    %254 = vmatpush1.msra.mxu0 0.0
    %255 = vmatprep.subr.mxu0 0.0
    %256 = vmatpush1.msra.mxu0 0.0
    %257 = vmatprep.subr.mxu0 0.0
    %258 = vmatpush1.msra.mxu0 0.0
    %259 = vmatprep.subr.mxu0 0.0
    %260 = vmatpush1.msra.mxu0 0.0
    %261 = vmatprep.subr.mxu0 0.0
    %262 = vmatpush1.msra.mxu0 0.0
    %263 = vmatprep.subr.mxu0 0.0
    %264 = vmatpush1.msra.mxu0 0.0
    %265 = vmatprep.subr.mxu0 0.0
    %266 = vmatpush1.msra.mxu0 0.0
    %267 = vmatprep.subr.mxu0 0.0
    %268 = vmatpush1.msra.mxu0 0.0
    %269 = vmatprep.subr.mxu0 0.0
    %270 = vmatpush1.msra.mxu0 0.0
    %271 = vmatprep.subr.mxu0 0.0
    %272 = vmatpush1.msra.mxu0 0.0
    %273 = vmatprep.subr.mxu0 0.0
    %274 = vmatpush1.msra.mxu0 0.0
    %275 = vmatprep.subr.mxu0 0.0
    %276 = vmatpush1.msra.mxu0 0.0
    %277 = vmatprep.subr.mxu0 0.0
    %278 = vmatpush1.msra.mxu0 0.0
    %279 = vmatprep.subr.mxu0 0.0
    %280 = vmatpush1.msra.mxu0 0.0
    %281 = vmatprep.subr.mxu0 0.0
    %282 = vmatpush1.msra.mxu0 0.0
    %283 = vmatprep.subr.mxu0 0.0
    %284 = vmatpush1.msra.mxu0 0.0
    %285 = vmatprep.subr.mxu0 0.0
    %286 = vmatpush1.msra.mxu0 0.0
    %287 = vmatprep.subr.mxu0 0.0
    %288 = vmatpush1.msra.mxu0 0.0
    %289 = vmatprep.subr.mxu0 0.0
    %290 = vmatpush1.msra.mxu0 0.0
    %291 = vmatprep.subr.mxu0 0.0
    %292 = vmatpush1.msra.mxu0 0.0
    %293 = vmatprep.subr.mxu0 0.0
    %294 = vmatpush1.msra.mxu0 0.0
    %295 = vmatprep.subr.mxu0 0.0
    %296 = vmatpush1.msra.mxu0 0.0
    %297 = vmatprep.subr.mxu0 0.0
    %298 = vmatpush1.msra.mxu0 0.0
    %299 = vmatprep.subr.mxu0 0.0
    %300 = vmatpush1.msra.mxu0 0.0
    %301 = vmatprep.subr.mxu0 0.0
    %302 = vmatpush1.msra.mxu0 0.0
    %303 = vmatprep.subr.mxu0 0.0
    %304 = vmatpush1.msra.mxu0 0.0
    %305 = vmatprep.subr.mxu0 0.0
    %306 = vmatpush1.msra.mxu0 0.0
    %307 = vmatprep.mubr.f32.mxu0 0.0
    %308 = vmatmul.mubr.f32.gmra.mrb[0].mxu0 %v238
    %v309 = vpop.f32.mrb[0].mxu0
    %v310 = vadd.f32 %v235, %v309
    %v311 = vpop.f32.mrb[0].mxu0
    %312 = vmatprep.mubr.f32.mxu0 0.0
    %313 = vmatmul.mubr.f32.gmra.mrb[0].mxu0 %v241
    %v314 = vpop.f32.mrb[0].mxu0
    %v315 = vadd.f32 %v235, %v314
    %v316 = vpop.f32.mrb[0].mxu0
    %317 = vdwg.mxu0
    %318 = vst.msk [vmem:[#allocation10] sm:$0xff] %vm142, %v310
    %319 = vst.msk [vmem:[#allocation10 + $0x8] sm:$0xff] %vm142, %v315
    %v320 = vld [vmem:[%s1] sm:$0xff]
    %v321 = vld [vmem:[%s1 + $0x8] sm:$0xff]
    %v322 = vld [vmem:[#allocation7] sm:$0xf]
    %324 = vset.pattern.permute.xlu0 0
    %325 = vperm.xlu0 %324, %v320
    %v326 = vpop.permute.xlu0 %325
    %329 = vset.pattern.permute.xlu0 0
    %330 = vperm.xlu0 %329, %v321
    %v331 = vpop.permute.xlu0 %330
    %v333 = vlaneseq
    %v334 = vshrl.u32 %v333, 7
    %v335 = vsub.s32 0, %v334
    %v336 = vrot.slane %v322, %v335
    %v337 = vmul.f32 %v326, %v336
    %v338 = vmul.f32 %v331, %v336
    %339 = vset.pattern.permute.xlu0 1
    %340 = vperm.xlu0 %339, %v320
    %v341 = vpop.permute.xlu0 %340
    %343 = vset.pattern.permute.xlu0 1
    %344 = vperm.xlu0 %343, %v321
    %v345 = vpop.permute.xlu0 %344
    %v347 = vlaneseq
    %v348 = vshrl.u32 %v347, 7
    %v349 = vsub.s32 1, %v348
    %v350 = vrot.slane %v322, %v349
    %v351 = vmul.f32 %v341, %v350
    %v352 = vmul.f32 %v345, %v350
    %v353 = vadd.f32 %v337, %v351
    %v354 = vadd.f32 %v338, %v352
    %355 = vset.pattern.permute.xlu0 2
    %356 = vperm.xlu0 %355, %v320
    %v357 = vpop.permute.xlu0 %356
    %359 = vset.pattern.permute.xlu0 2
    %360 = vperm.xlu0 %359, %v321
    %v361 = vpop.permute.xlu0 %360
    %v363 = vlaneseq
    %v364 = vshrl.u32 %v363, 7
    %v365 = vsub.s32 2, %v364
    %v366 = vrot.slane %v322, %v365
    %v367 = vmul.f32 %v357, %v366
    %v368 = vmul.f32 %v361, %v366
    %v369 = vadd.f32 %v353, %v367
    %v370 = vadd.f32 %v354, %v368
    %371 = vset.pattern.permute.xlu0 3
    %372 = vperm.xlu0 %371, %v320
    %v373 = vpop.permute.xlu0 %372
    %375 = vset.pattern.permute.xlu0 3
    %376 = vperm.xlu0 %375, %v321
    %v377 = vpop.permute.xlu0 %376
    %v379 = vlaneseq
    %v380 = vshrl.u32 %v379, 7
    %v381 = vsub.s32 3, %v380
    %v382 = vrot.slane %v322, %v381
    %v383 = vmul.f32 %v373, %v382
    %v384 = vmul.f32 %v377, %v382
    %v385 = vadd.f32 %v369, %v383
    %v386 = vadd.f32 %v370, %v384
    %v387 = vld [vmem:[%s9] sm:$0x1]
    %v389 = vlaneseq
    %v390 = vshrl.u32 %v389, 7
    %v391 = vsub.s32 0, %v390
    %v392 = vrot.slane %v387, %v391
    %v394 = vadd.f32 %v385, %v392
    %v395 = vadd.f32 %v386, %v392
    %v396 = vmax.f32 %v394, 0.0
    %v397 = vmax.f32 %v395, 0.0
    %v398 = vld [vmem:[%s10] sm:$0xff]
    %v399 = vld [vmem:[%s10 + $0x8] sm:$0xff]
    %v400 = vld [vmem:[%s10 + $0x10] sm:$0xff]
    %v401 = vld [vmem:[%s10 + $0x18] sm:$0xff]
    %v402 = vld [vmem:[%s11] sm:$0x1]
    %v404 = vlaneseq
    %v405 = vshrl.u32 %v404, 7
    %v406 = vsub.s32 0, %v405
    %v407 = vrot.slane %v402, %v406
    %v410 = vsel %vm142, %v396, 0
    %v413 = vsel %vm142, %v397, 0
    %415 = vmatprep.subr.mxu0 0.0
    %416 = vmatpush1.msra.mxu0 %v398
    %417 = vmatprep.subr.mxu0 0.0
    %418 = vmatpush1.msra.mxu0 %v399
    %419 = vmatprep.subr.mxu0 0.0
    %420 = vmatpush1.msra.mxu0 %v400
    %421 = vmatprep.subr.mxu0 0.0
    %422 = vmatpush1.msra.mxu0 %v401
    %423 = vmatprep.subr.mxu0 0.0
    %424 = vmatpush1.msra.mxu0 0.0
    %425 = vmatprep.subr.mxu0 0.0
    %426 = vmatpush1.msra.mxu0 0.0
    %427 = vmatprep.subr.mxu0 0.0
    %428 = vmatpush1.msra.mxu0 0.0
    %429 = vmatprep.subr.mxu0 0.0
    %430 = vmatpush1.msra.mxu0 0.0
    %431 = vmatprep.subr.mxu0 0.0
    %432 = vmatpush1.msra.mxu0 0.0
    %433 = vmatprep.subr.mxu0 0.0
    %434 = vmatpush1.msra.mxu0 0.0
    %435 = vmatprep.subr.mxu0 0.0
    %436 = vmatpush1.msra.mxu0 0.0
    %437 = vmatprep.subr.mxu0 0.0
    %438 = vmatpush1.msra.mxu0 0.0
    %439 = vmatprep.subr.mxu0 0.0
    %440 = vmatpush1.msra.mxu0 0.0
    %441 = vmatprep.subr.mxu0 0.0
    %442 = vmatpush1.msra.mxu0 0.0
    %443 = vmatprep.subr.mxu0 0.0
    %444 = vmatpush1.msra.mxu0 0.0
    %445 = vmatprep.subr.mxu0 0.0
    %446 = vmatpush1.msra.mxu0 0.0
    %447 = vmatprep.subr.mxu0 0.0
    %448 = vmatpush1.msra.mxu0 0.0
    %449 = vmatprep.subr.mxu0 0.0
    %450 = vmatpush1.msra.mxu0 0.0
    %451 = vmatprep.subr.mxu0 0.0
    %452 = vmatpush1.msra.mxu0 0.0
    %453 = vmatprep.subr.mxu0 0.0
    %454 = vmatpush1.msra.mxu0 0.0
    %455 = vmatprep.subr.mxu0 0.0
    %456 = vmatpush1.msra.mxu0 0.0
    %457 = vmatprep.subr.mxu0 0.0
    %458 = vmatpush1.msra.mxu0 0.0
    %459 = vmatprep.subr.mxu0 0.0
    %460 = vmatpush1.msra.mxu0 0.0
    %461 = vmatprep.subr.mxu0 0.0
    %462 = vmatpush1.msra.mxu0 0.0
    %463 = vmatprep.subr.mxu0 0.0
    %464 = vmatpush1.msra.mxu0 0.0
    %465 = vmatprep.subr.mxu0 0.0
    %466 = vmatpush1.msra.mxu0 0.0
    %467 = vmatprep.subr.mxu0 0.0
    %468 = vmatpush1.msra.mxu0 0.0
    %469 = vmatprep.subr.mxu0 0.0
    %470 = vmatpush1.msra.mxu0 0.0
    %471 = vmatprep.subr.mxu0 0.0
    %472 = vmatpush1.msra.mxu0 0.0
    %473 = vmatprep.subr.mxu0 0.0
    %474 = vmatpush1.msra.mxu0 0.0
    %475 = vmatprep.subr.mxu0 0.0
    %476 = vmatpush1.msra.mxu0 0.0
    %477 = vmatprep.subr.mxu0 0.0
    %478 = vmatpush1.msra.mxu0 0.0
    %479 = vmatprep.mubr.f32.mxu0 0.0
    %480 = vmatmul.mubr.f32.gmra.mrb[0].mxu0 %v410
    %v481 = vpop.f32.mrb[0].mxu0
    %v482 = vadd.f32 %v407, %v481
    %v483 = vpop.f32.mrb[0].mxu0
    %484 = vmatprep.mubr.f32.mxu0 0.0
    %485 = vmatmul.mubr.f32.gmra.mrb[0].mxu0 %v413
    %v486 = vpop.f32.mrb[0].mxu0
    %v487 = vadd.f32 %v407, %v486
    %v488 = vpop.f32.mrb[0].mxu0
    %489 = vdwg.mxu0
    %v490 = vmax.f32 %v482, 0.0
    %v491 = vmax.f32 %v487, 0.0
    %v492 = vld [vmem:[#allocation8] sm:$0xff]
    %v493 = vld [vmem:[#allocation8 + $0x8] sm:$0xff]
    %v494 = vld [vmem:[#allocation8 + $0x10] sm:$0xff]
    %v495 = vld [vmem:[#allocation8 + $0x18] sm:$0xff]
    %v496 = vld [vmem:[%s13] sm:$0x1]
    %v498 = vlaneseq
    %v499 = vshrl.u32 %v498, 7
    %v500 = vsub.s32 0, %v499
    %v501 = vrot.slane %v496, %v500
    %v504 = vsel %vm142, %v490, 0
    %v507 = vsel %vm142, %v491, 0
    %509 = vmatprep.subr.mxu0 0.0
    %510 = vmatpush1.msra.mxu0 %v492
    %511 = vmatprep.subr.mxu0 0.0
    %512 = vmatpush1.msra.mxu0 %v493
    %513 = vmatprep.subr.mxu0 0.0
    %514 = vmatpush1.msra.mxu0 %v494
    %515 = vmatprep.subr.mxu0 0.0
    %516 = vmatpush1.msra.mxu0 %v495
    %517 = vmatprep.subr.mxu0 0.0
    %518 = vmatpush1.msra.mxu0 0.0
    %519 = vmatprep.subr.mxu0 0.0
    %520 = vmatpush1.msra.mxu0 0.0
    %521 = vmatprep.subr.mxu0 0.0
    %522 = vmatpush1.msra.mxu0 0.0
    %523 = vmatprep.subr.mxu0 0.0
    %524 = vmatpush1.msra.mxu0 0.0
    %525 = vmatprep.subr.mxu0 0.0
    %526 = vmatpush1.msra.mxu0 0.0
    %527 = vmatprep.subr.mxu0 0.0
    %528 = vmatpush1.msra.mxu0 0.0
    %529 = vmatprep.subr.mxu0 0.0
    %530 = vmatpush1.msra.mxu0 0.0
    %531 = vmatprep.subr.mxu0 0.0
    %532 = vmatpush1.msra.mxu0 0.0
    %533 = vmatprep.subr.mxu0 0.0
    %534 = vmatpush1.msra.mxu0 0.0
    %535 = vmatprep.subr.mxu0 0.0
    %536 = vmatpush1.msra.mxu0 0.0
    %537 = vmatprep.subr.mxu0 0.0
    %538 = vmatpush1.msra.mxu0 0.0
    %539 = vmatprep.subr.mxu0 0.0
    %540 = vmatpush1.msra.mxu0 0.0
    %541 = vmatprep.subr.mxu0 0.0
    %542 = vmatpush1.msra.mxu0 0.0
    %543 = vmatprep.subr.mxu0 0.0
    %544 = vmatpush1.msra.mxu0 0.0
    %545 = vmatprep.subr.mxu0 0.0
    %546 = vmatpush1.msra.mxu0 0.0
    %547 = vmatprep.subr.mxu0 0.0
    %548 = vmatpush1.msra.mxu0 0.0
    %549 = vmatprep.subr.mxu0 0.0
    %550 = vmatpush1.msra.mxu0 0.0
    %551 = vmatprep.subr.mxu0 0.0
    %552 = vmatpush1.msra.mxu0 0.0
    %553 = vmatprep.subr.mxu0 0.0
    %554 = vmatpush1.msra.mxu0 0.0
    %555 = vmatprep.subr.mxu0 0.0
    %556 = vmatpush1.msra.mxu0 0.0
    %557 = vmatprep.subr.mxu0 0.0
    %558 = vmatpush1.msra.mxu0 0.0
    %559 = vmatprep.subr.mxu0 0.0
    %560 = vmatpush1.msra.mxu0 0.0
    %561 = vmatprep.subr.mxu0 0.0
    %562 = vmatpush1.msra.mxu0 0.0
    %563 = vmatprep.subr.mxu0 0.0
    %564 = vmatpush1.msra.mxu0 0.0
    %565 = vmatprep.subr.mxu0 0.0
    %566 = vmatpush1.msra.mxu0 0.0
    %567 = vmatprep.subr.mxu0 0.0
    %568 = vmatpush1.msra.mxu0 0.0
    %569 = vmatprep.subr.mxu0 0.0
    %570 = vmatpush1.msra.mxu0 0.0
    %571 = vmatprep.subr.mxu0 0.0
    %572 = vmatpush1.msra.mxu0 0.0
    %573 = vmatprep.mubr.f32.mxu0 0.0
    %574 = vmatmul.mubr.f32.gmra.mrb[0].mxu0 %v504
    %v575 = vpop.f32.mrb[0].mxu0
    %v576 = vadd.f32 %v501, %v575
    %v577 = vpop.f32.mrb[0].mxu0
    %578 = vmatprep.mubr.f32.mxu0 0.0
    %579 = vmatmul.mubr.f32.gmra.mrb[0].mxu0 %v507
    %v580 = vpop.f32.mrb[0].mxu0
    %v581 = vadd.f32 %v501, %v580
    %v582 = vpop.f32.mrb[0].mxu0
    %583 = vdwg.mxu0
    %586 = vrot.lane.b32.xlu0 %v576, 32
    %v587 = vpop.permute.xlu0 %586
    %588 = vrot.lane.b32.xlu0 %v581, 32
    %v589 = vpop.permute.xlu0 %588
    %vm592 = vcmask 523520
    %593 = vst.msk [vmem:[#allocation10] sm:$0xff] %vm592, %v587
    %594 = vst.msk [vmem:[#allocation10 + $0x8] sm:$0xff] %vm592, %v589
    // Predicated region
    $region74: #{tpu_custom_call.1} parent=1 // pred_check
      _
    $region75: #{tpu_custom_call.1} parent=1 // pred_check_branch
      %596 = sbr.rel (0) target = $region77
    $region76: #{tpu_custom_call.1} parent=1 // pred_region
      %s598 = ssub.s32 256, 256
      %599 = vsyncadd [#allocation4], %s598
      %s600 = sshll.u32 [#allocation10], 4
      %s601 = int_to_ptr.vmem [resolvable:$true] %s600
      %606 = dma.vmem_to_hbm [thread:$0]  %s601, 256, %s14, [#allocation4], 128, 128, 8
    $region77: #{tpu_custom_call.1} parent=1 // pred_fallthru
      _
    // Predicated region
    $region78: #{tpu_custom_call.1} parent=1 // pred_check
      _
    $region79: #{tpu_custom_call.1} parent=1 // pred_check_branch
      %608 = sbr.rel (0) target = $region81
    $region80: #{tpu_custom_call.1} parent=1 // pred_region
      %609 = dma.done [#allocation4], 256
    $region81: #{tpu_custom_call.1} parent=1 // pred_fallthru
      _
    %610 = vsyncpa [#allocation3], 1
    %611 = vsyncpa [#allocation6], 1
    %612 = vsyncpa [#allocation9], 1
    %613 = vsyncpa [#allocation4], 1

</llo_original>
